<compile_context>
chip_gen: v6e
topology: v6e:2x2x1
jax: 0.10.0
libtpu: 0.0.40
codegen_flags: <defaults>
</compile_context>

<pallas_src>
import jax
import jax.numpy as jnp
from jax.experimental import pallas as pl
from jax.experimental.pallas import tpu as pltpu


def policy_net_kernel(xT_ref, w1_ref, b1_ref, w2_ref, b2_ref, w3_ref, b3_ref, outT_ref):
    """One batch tile: xT (S, TB) f32 -> outT (A, TB) f32 softmax probs (softmax over axis 0)."""
    xT = xT_ref[...]                                                    # (S, TB) f32

    # fc1 + ReLU:  (L, S) @ (S, TB) -> (L, TB), f32 accumulation on the MXU.
    h1 = jnp.dot(w1_ref[...], xT, preferred_element_type=jnp.float32) + b1_ref[...]
    h1 = jnp.maximum(h1, 0.0)

    # fc2 + ReLU (no intermediate dtype cast: MXU has huge headroom, casts were VPU overhead).
    h2 = jnp.dot(w2_ref[...], h1, preferred_element_type=jnp.float32) + b2_ref[...]
    h2 = jnp.maximum(h2, 0.0)

    # fc3 logits: (A, L) @ (L, TB) -> (A, TB)
    logits = jnp.dot(w3_ref[...], h2, preferred_element_type=jnp.float32) + b3_ref[...]

    if outT_ref.shape[0] == 2:
        # 2-action softmax == sigmoid of the logit difference: no cross-sublane reductions,
        # rows sum to exactly 1.
        d = logits[1:2, :] - logits[0:1, :]                             # (1, TB)
        p1 = 1.0 / (1.0 + jnp.exp(-d))
        outT_ref[0:1, :] = (1.0 - p1).astype(outT_ref.dtype)
        outT_ref[1:2, :] = p1.astype(outT_ref.dtype)
    else:
        # Numerically stable softmax over the action axis (axis 0 in transposed layout),
        # exact normalization (division on a (1, TB) slice is negligible).
        m = jnp.max(logits, axis=0, keepdims=True)
        e = jnp.exp(logits - m)
        outT_ref[...] = (e / jnp.sum(e, axis=0, keepdims=True)).astype(outT_ref.dtype)


def init_params(key, state_size, action_size, layer_size=24):
    """nn.Linear-style init (uniform +-1/sqrt(fan_in)). Weights (out, in), biases (out, 1). f32."""
    ks = jax.random.split(key, 6)

    def lin(kw, kb, fan_in, fan_out):
        bound = 1.0 / (fan_in ** 0.5)
        w = jax.random.uniform(kw, (fan_out, fan_in), jnp.float32, -bound, bound)
        b = jax.random.uniform(kb, (fan_out, 1), jnp.float32, -bound, bound)
        return w, b

    w1, b1 = lin(ks[0], ks[1], state_size, layer_size)
    w2, b2 = lin(ks[2], ks[3], layer_size, layer_size)
    w3, b3 = lin(ks[4], ks[5], layer_size, action_size)
    return (w1, b1, w2, b2, w3, b3)


def _pick_batch_tile(Bp, tb_cap):
    """Bp is a multiple of 128. Tile = multiple of 128, <= cap, and ~half the batch so the
    grid has >= 2 steps whenever Bp >= 256 (feeds both v7x TensorCores)."""
    cap = max(128, (int(tb_cap) // 128) * 128)
    n128 = Bp // 128
    tb = 128 * max(1, (n128 + 1) // 2)
    return min(cap, tb)


def policy_network_forward_T(stateT, params, tb_cap=32768, vmem_limit_bytes=None):
    """Efficient entry point: stateT (state_size, B) f32 -> (action_size, B) f32 probs.

    Keeps the batch on the 128-lane axis end-to-end (lane-dense loads/stores), with no
    wrapper-side transpose passes. On v5e/v6e (128 MiB VMEM) tb_cap can be raised to
    ~131072 together with vmem_limit_bytes; the default fits v7x's 64 MiB VMEM.
    """
    w1, b1, w2, b2, w3, b3 = params
    state_size, B = stateT.shape
    layer_size = w1.shape[0]
    action_size = w3.shape[0]

    # Pad the batch only to lane granularity (128), not to a multiple of the tile.
    Bp = pl.cdiv(B, 128) * 128
    if Bp != B:
        stateT = jnp.pad(stateT, ((0, 0), (0, Bp - B)))

    tb = _pick_batch_tile(Bp, tb_cap)
    grid = (pl.cdiv(Bp, tb),)                     # ragged last tile handled by write-masking

    const = lambda i: (0, 0)                      # weights/biases resident across the batch grid
    flops = 2 * Bp * (state_size * layer_size + layer_size * layer_size
                      + layer_size * action_size)
    transcendentals = Bp if action_size == 2 else Bp * action_size
    bytes_accessed = (4 * Bp * (state_size + action_size)
                      + sum(int(p.size) * p.dtype.itemsize for p in params))

    probsT = pl.pallas_call(
        policy_net_kernel,
        out_shape=jax.ShapeDtypeStruct((action_size, Bp), jnp.float32),
        grid=grid,
        in_specs=[
            pl.BlockSpec((state_size, tb), lambda i: (0, i)),      # x^T batch tile (lane-dense)
            pl.BlockSpec((layer_size, state_size), const),         # W1 (out, in)
            pl.BlockSpec((layer_size, 1), const),                  # b1
            pl.BlockSpec((layer_size, layer_size), const),         # W2
            pl.BlockSpec((layer_size, 1), const),                  # b2
            pl.BlockSpec((action_size, layer_size), const),        # W3
            pl.BlockSpec((action_size, 1), const),                 # b3
        ],
        out_specs=pl.BlockSpec((action_size, tb), lambda i: (0, i)),
        compiler_params=pltpu.CompilerParams(
            dimension_semantics=("parallel",),
            vmem_limit_bytes=vmem_limit_bytes),
        cost_estimate=pl.CostEstimate(flops=flops,
                                      transcendentals=transcendentals,
                                      bytes_accessed=bytes_accessed),
    )(stateT, w1, b1, w2, b2, w3, b3)

    return probsT[:, :B]


def policy_network_forward(state, params, tb_cap=32768):
    """PyTorch-facing wrapper: state (B, state_size) f32 -> (B, action_size) f32 probs.

    The two boundary transposes here are full HBM passes; callers that can keep the
    (S, B)/(A, B) layout should use policy_network_forward_T directly (per perf review).
    """
    return policy_network_forward_T(state.T, params, tb_cap=tb_cap).T


def reference_forward(state, params):
    """Plain-JAX f32 reference (PyTorch semantics)."""
    w1, b1, w2, b2, w3, b3 = params
    h1 = jnp.maximum(state @ w1.T + b1.T, 0.0)
    h2 = jnp.maximum(h1 @ w2.T + b2.T, 0.0)
    logits = h2 @ w3.T + b3.T
    return jax.nn.softmax(logits, axis=-1)


if __name__ == "__main__":
    key = jax.random.PRNGKey(0)
    k_params, k_params3, k_state, k_state_big = jax.random.split(key, 4)

    state_size = 4      # e.g. CartPole observation dim
    action_size = 2     # e.g. CartPole actions
    layer_size = 24

    params = init_params(k_params, state_size, action_size, layer_size)

    # Small batch (pads to one 128-wide lane tile) — exercises the 2-action sigmoid path.
    state = jax.random.normal(k_state, (2, state_size), jnp.float32)
    probs = jax.block_until_ready(policy_network_forward(state, params))
    ref = reference_forward(state, params)
    assert probs.shape == (2, action_size)
    assert jnp.allclose(probs, ref, atol=1e-4, rtol=1e-4)
    assert jnp.allclose(jnp.sum(probs, axis=-1), 1.0, atol=1e-5)

    # Larger batch — exercises a multi-step batch grid (2 tiles of 256).
    state_big = jax.random.normal(k_state_big, (512, state_size), jnp.float32)
    probs_big = jax.block_until_ready(policy_network_forward(state_big, params))
    ref_big = reference_forward(state_big, params)
    assert probs_big.shape == (512, action_size)
    assert jnp.allclose(probs_big, ref_big, atol=1e-4, rtol=1e-4)

    # 3-action head — exercises the general softmax path.
    params3 = init_params(k_params3, state_size, 3, layer_size)
    probs3 = jax.block_until_ready(policy_network_forward(state_big, params3))
    ref3 = reference_forward(state_big, params3)
    assert probs3.shape == (512, 3)
    assert jnp.allclose(probs3, ref3, atol=1e-4, rtol=1e-4)
    assert jnp.allclose(jnp.sum(probs3, axis=-1), 1.0, atol=1e-5)

    print("KERNEL_OK")
</pallas_src>

<mosaic_0001>
module attributes {stable_mosaic.version = 11 : i64} {
  func.func @policy_net_kernel(%arg0: i32, %arg1: memref<4x128xf32, #tpu.memory_space<vmem>>, %arg2: memref<24x4xf32, #tpu.memory_space<vmem>>, %arg3: memref<24x1xf32, #tpu.memory_space<vmem>>, %arg4: memref<24x24xf32, #tpu.memory_space<vmem>>, %arg5: memref<24x1xf32, #tpu.memory_space<vmem>>, %arg6: memref<2x24xf32, #tpu.memory_space<vmem>>, %arg7: memref<2x1xf32, #tpu.memory_space<vmem>>, %arg8: memref<2x128xf32, #tpu.memory_space<vmem>>) attributes {dimension_semantics = [#tpu.dimension_semantics<parallel>], iteration_bounds = array<i64: 1>, scalar_prefetch = 0 : i64, scratch_operands = 0 : i64, tpu.core_type = #tpu.core_type<tc>, window_params = [{transform_indices = @transform_0, window_bounds = array<i64: 4, 128>}, {pipeline_mode = #tpu.pipeline_mode<synchronous>, transform_indices = @transform_1, window_bounds = array<i64: 24, 4>}, {pipeline_mode = #tpu.pipeline_mode<synchronous>, transform_indices = @transform_2, window_bounds = array<i64: 24, 1>}, {pipeline_mode = #tpu.pipeline_mode<synchronous>, transform_indices = @transform_3, window_bounds = array<i64: 24, 24>}, {pipeline_mode = #tpu.pipeline_mode<synchronous>, transform_indices = @transform_4, window_bounds = array<i64: 24, 1>}, {pipeline_mode = #tpu.pipeline_mode<synchronous>, transform_indices = @transform_5, window_bounds = array<i64: 2, 24>}, {pipeline_mode = #tpu.pipeline_mode<synchronous>, transform_indices = @transform_6, window_bounds = array<i64: 2, 1>}, {transform_indices = @transform_7, window_bounds = array<i64: 2, 128>}]} {
    %c0 = arith.constant 0 : index
    %c0_0 = arith.constant 0 : index
    %0 = vector.load %arg1[%c0, %c0_0] : memref<4x128xf32, #tpu.memory_space<vmem>>, vector<4x128xf32>
    %c0_1 = arith.constant 0 : index
    %c0_2 = arith.constant 0 : index
    %1 = vector.load %arg2[%c0_1, %c0_2] : memref<24x4xf32, #tpu.memory_space<vmem>>, vector<24x4xf32>
    %cst = arith.constant dense<0.000000e+00> : vector<24x128xf32>
    %2 = tpu.matmul %1, %0, %cst {dimension_numbers = #tpu.dot_dimension_numbers<[1], [0], [0], [1], [0, 0, 1, 1], [], []>} : vector<24x4xf32>, vector<4x128xf32>, vector<24x128xf32> -> vector<24x128xf32>
    %c0_3 = arith.constant 0 : index
    %c0_4 = arith.constant 0 : index
    %3 = vector.load %arg3[%c0_3, %c0_4] : memref<24x1xf32, #tpu.memory_space<vmem>>, vector<24x1xf32>
    %4 = vector.broadcast %3 : vector<24x1xf32> to vector<24x128xf32>
    %5 = arith.addf %2, %4 : vector<24x128xf32>
    %cst_5 = arith.constant 0.000000e+00 : f32
    %6 = vector.broadcast %cst_5 : f32 to vector<24x128xf32>
    %7 = arith.maximumf %5, %6 : vector<24x128xf32>
    %c0_6 = arith.constant 0 : index
    %c0_7 = arith.constant 0 : index
    %8 = vector.load %arg4[%c0_6, %c0_7] : memref<24x24xf32, #tpu.memory_space<vmem>>, vector<24x24xf32>
    %cst_8 = arith.constant dense<0.000000e+00> : vector<24x128xf32>
    %9 = tpu.matmul %8, %7, %cst_8 {dimension_numbers = #tpu.dot_dimension_numbers<[1], [0], [0], [1], [0, 0, 1, 1], [], []>} : vector<24x24xf32>, vector<24x128xf32>, vector<24x128xf32> -> vector<24x128xf32>
    %c0_9 = arith.constant 0 : index
    %c0_10 = arith.constant 0 : index
    %10 = vector.load %arg5[%c0_9, %c0_10] : memref<24x1xf32, #tpu.memory_space<vmem>>, vector<24x1xf32>
    %11 = vector.broadcast %10 : vector<24x1xf32> to vector<24x128xf32>
    %12 = arith.addf %9, %11 : vector<24x128xf32>
    %cst_11 = arith.constant 0.000000e+00 : f32
    %13 = vector.broadcast %cst_11 : f32 to vector<24x128xf32>
    %14 = arith.maximumf %12, %13 : vector<24x128xf32>
    %c0_12 = arith.constant 0 : index
    %c0_13 = arith.constant 0 : index
    %15 = vector.load %arg6[%c0_12, %c0_13] : memref<2x24xf32, #tpu.memory_space<vmem>>, vector<2x24xf32>
    %cst_14 = arith.constant dense<0.000000e+00> : vector<2x128xf32>
    %16 = tpu.matmul %15, %14, %cst_14 {dimension_numbers = #tpu.dot_dimension_numbers<[1], [0], [0], [1], [0, 0, 1, 1], [], []>} : vector<2x24xf32>, vector<24x128xf32>, vector<2x128xf32> -> vector<2x128xf32>
    %c0_15 = arith.constant 0 : index
    %c0_16 = arith.constant 0 : index
    %17 = vector.load %arg7[%c0_15, %c0_16] : memref<2x1xf32, #tpu.memory_space<vmem>>, vector<2x1xf32>
    %18 = vector.broadcast %17 : vector<2x1xf32> to vector<2x128xf32>
    %19 = arith.addf %16, %18 : vector<2x128xf32>
    %20 = vector.extract_strided_slice %19 {offsets = [1, 0], sizes = [1, 128], strides = [1, 1]} : vector<2x128xf32> to vector<1x128xf32>
    %21 = vector.extract_strided_slice %19 {offsets = [0, 0], sizes = [1, 128], strides = [1, 1]} : vector<2x128xf32> to vector<1x128xf32>
    %22 = arith.subf %20, %21 : vector<1x128xf32>
    %cst_17 = arith.constant 0.000000e+00 : f32
    %23 = vector.broadcast %cst_17 : f32 to vector<1x128xf32>
    %24 = arith.subf %23, %22 : vector<1x128xf32>
    %25 = math.exp %24 : vector<1x128xf32>
    %cst_18 = arith.constant 1.000000e+00 : f32
    %26 = vector.broadcast %cst_18 : f32 to vector<1x128xf32>
    %27 = arith.addf %26, %25 : vector<1x128xf32>
    %cst_19 = arith.constant 1.000000e+00 : f32
    %28 = vector.broadcast %cst_19 : f32 to vector<1x128xf32>
    %29 = arith.divf %28, %27 : vector<1x128xf32>
    %cst_20 = arith.constant 1.000000e+00 : f32
    %30 = vector.broadcast %cst_20 : f32 to vector<1x128xf32>
    %31 = arith.subf %30, %29 : vector<1x128xf32>
    %c0_21 = arith.constant 0 : index
    %c0_22 = arith.constant 0 : index
    %32 = vector.load %arg8[%c0_21, %c0_22] : memref<2x128xf32, #tpu.memory_space<vmem>>, vector<1x128xf32>
    tpu.vector_store %arg8[%c0_21, %c0_22], %31 {strides = array<i32>} : memref<2x128xf32, #tpu.memory_space<vmem>>, vector<1x128xf32>,
    %c1 = arith.constant 1 : index
    %c0_23 = arith.constant 0 : index
    %33 = vector.load %arg8[%c1, %c0_23] : memref<2x128xf32, #tpu.memory_space<vmem>>, vector<1x128xf32>
    tpu.vector_store %arg8[%c1, %c0_23], %29 {strides = array<i32>} : memref<2x128xf32, #tpu.memory_space<vmem>>, vector<1x128xf32>,
    return
  }
  func.func @transform_0(%arg0: i32) -> (i32, i32) {
    %c0_i32 = arith.constant 0 : i32
    %c0_i32_0 = arith.constant 0 : i32
    return %c0_i32, %arg0 : i32, i32
  }
  func.func @transform_1(%arg0: i32) -> (i32, i32) {
    %c0_i32 = arith.constant 0 : i32
    %c0_i32_0 = arith.constant 0 : i32
    %c0_i32_1 = arith.constant 0 : i32
    return %c0_i32, %c0_i32_0 : i32, i32
  }
  func.func @transform_2(%arg0: i32) -> (i32, i32) {
    %c0_i32 = arith.constant 0 : i32
    %c0_i32_0 = arith.constant 0 : i32
    %c0_i32_1 = arith.constant 0 : i32
    return %c0_i32, %c0_i32_0 : i32, i32
  }
  func.func @transform_3(%arg0: i32) -> (i32, i32) {
    %c0_i32 = arith.constant 0 : i32
    %c0_i32_0 = arith.constant 0 : i32
    %c0_i32_1 = arith.constant 0 : i32
    return %c0_i32, %c0_i32_0 : i32, i32
  }
  func.func @transform_4(%arg0: i32) -> (i32, i32) {
    %c0_i32 = arith.constant 0 : i32
    %c0_i32_0 = arith.constant 0 : i32
    %c0_i32_1 = arith.constant 0 : i32
    return %c0_i32, %c0_i32_0 : i32, i32
  }
  func.func @transform_5(%arg0: i32) -> (i32, i32) {
    %c0_i32 = arith.constant 0 : i32
    %c0_i32_0 = arith.constant 0 : i32
    %c0_i32_1 = arith.constant 0 : i32
    return %c0_i32, %c0_i32_0 : i32, i32
  }
  func.func @transform_6(%arg0: i32) -> (i32, i32) {
    %c0_i32 = arith.constant 0 : i32
    %c0_i32_0 = arith.constant 0 : i32
    %c0_i32_1 = arith.constant 0 : i32
    return %c0_i32, %c0_i32_0 : i32, i32
  }
  func.func @transform_7(%arg0: i32) -> (i32, i32) {
    %c0_i32 = arith.constant 0 : i32
    %c0_i32_0 = arith.constant 0 : i32
    return %c0_i32, %arg0 : i32, i32
  }
}

</mosaic_0001>

<llo_original>
// kernel: tpu_custom_call.1
$region0: #{tpu_custom_call.1}
  #allocation0 [shape = 'u32[]', space=smem, size = 0x4, offset = 0x4, fixed_abs, tag = 'smem constant byte address 0x4 - core index']
  #allocation1 [shape = 'u32[144,128]{1,0:T(1,128)}', space=vmem, size = 0x12000, scoped, tag = 'internal scratch']
  %s0 = inlined_call_operand.vmem [shape: f32[4,128], index: 0, kind: input, shape index: {}]
  %s1 = inlined_call_operand.vmem [shape: f32[24,4], index: 1, kind: input, shape index: {}]
  %s2 = inlined_call_operand.vmem [shape: f32[24,1], index: 2, kind: input, shape index: {}]
  %s3 = inlined_call_operand.vmem [shape: f32[24,24], index: 3, kind: input, shape index: {}]
  %s4 = inlined_call_operand.vmem [shape: f32[24,1], index: 4, kind: input, shape index: {}]
  %s5 = inlined_call_operand.vmem [shape: f32[2,24], index: 5, kind: input, shape index: {}]
  %s6 = inlined_call_operand.vmem [shape: f32[2,1], index: 6, kind: input, shape index: {}]
  %s7 = inlined_call_operand.hbm [shape: f32[2,128], index: 7, kind: output, shape index: {}]
  %s8 = sld [smem:[#allocation0]]
  $region38: #{tpu_custom_call.1} parent=0
    _
  %s10 = ssub.s32 1, %s8
  %s11 = scalar_select 0, %s10, %s8
  $region1: #{tpu_custom_call.1} parent=0
    #allocation2 [shape = 'u8[1024]{0}', space=vmem, size = 0x400, scoped, tag = 'output window, operand 0, single buffered']
    #allocation3 [shape = 's32[1]{0}', space=sflag, size = 0x4, scoped, tag = 'scoped memory for tpu_custom_call.1']
    %12 = vsyncpa [#allocation3], 0
    // Predicated region
    $region2: #{tpu_custom_call.1} parent=1 // pred_check
      _
    $region3: #{tpu_custom_call.1} parent=1 // pred_check_branch
      %14 = sbr.rel (0) target = $region5
    $region4: #{tpu_custom_call.1} parent=1 // pred_region
      _
    $region5: #{tpu_custom_call.1} parent=1 // pred_fallthru
      _
    // Predicated region
    $region6: #{tpu_custom_call.1} parent=1 // pred_check
      _
    $region7: #{tpu_custom_call.1} parent=1 // pred_check_branch
      %16 = sbr.rel (0) target = $region9
    $region8: #{tpu_custom_call.1} parent=1 // pred_region
      _
    $region9: #{tpu_custom_call.1} parent=1 // pred_fallthru
      _
    // Predicated region
    $region10: #{tpu_custom_call.1} parent=1 // pred_check
      _
    $region11: #{tpu_custom_call.1} parent=1 // pred_check_branch
      %18 = sbr.rel (0) target = $region13
    $region12: #{tpu_custom_call.1} parent=1 // pred_region
      _
    $region13: #{tpu_custom_call.1} parent=1 // pred_fallthru
      _
    // Predicated region
    $region14: #{tpu_custom_call.1} parent=1 // pred_check
      _
    $region15: #{tpu_custom_call.1} parent=1 // pred_check_branch
      %20 = sbr.rel (0) target = $region17
    $region16: #{tpu_custom_call.1} parent=1 // pred_region
      _
    $region17: #{tpu_custom_call.1} parent=1 // pred_fallthru
      _
    // Predicated region
    $region18: #{tpu_custom_call.1} parent=1 // pred_check
      _
    $region19: #{tpu_custom_call.1} parent=1 // pred_check_branch
      %22 = sbr.rel (0) target = $region21
    $region20: #{tpu_custom_call.1} parent=1 // pred_region
      _
    $region21: #{tpu_custom_call.1} parent=1 // pred_fallthru
      _
    // Predicated region
    $region22: #{tpu_custom_call.1} parent=1 // pred_check
      _
    $region23: #{tpu_custom_call.1} parent=1 // pred_check_branch
      %24 = sbr.rel (0) target = $region25
    $region24: #{tpu_custom_call.1} parent=1 // pred_region
      _
    $region25: #{tpu_custom_call.1} parent=1 // pred_fallthru
      _
    // Predicated region
    $region26: #{tpu_custom_call.1} parent=1 // pred_check
      _
    $region27: #{tpu_custom_call.1} parent=1 // pred_check_branch
      %26 = sbr.rel (0) target = $region29
    $region28: #{tpu_custom_call.1} parent=1 // pred_region
      _
    $region29: #{tpu_custom_call.1} parent=1 // pred_fallthru
      _
    %v27 = vld [vmem:[%s0] sm:$0xf]
    %v28 = vld [vmem:[%s1] sm:$0xff]
    %v29 = vld [vmem:[%s1 + $0x8] sm:$0xff]
    %v30 = vld [vmem:[%s1 + $0x10] sm:$0xff]
    %v31 = vld [vmem:[%s2] sm:$0xff]
    %v32 = vld [vmem:[%s2 + $0x8] sm:$0xff]
    %v33 = vld [vmem:[%s2 + $0x10] sm:$0xff]
    %35 = vset.pattern.permute.xlu0 0
    %36 = vperm.xlu0 %35, %v31
    %v37 = vpop.permute.xlu0 %36
    %40 = vset.pattern.permute.xlu0 0
    %41 = vperm.xlu0 %40, %v32
    %v42 = vpop.permute.xlu0 %41
    %45 = vset.pattern.permute.xlu0 0
    %46 = vperm.xlu0 %45, %v33
    %v47 = vpop.permute.xlu0 %46
    %vm49 = vcmask 31744
    %v51 = vsel %vm49, %v28, 0
    %v54 = vsel %vm49, %v29, 0
    %v57 = vsel %vm49, %v30, 0
    %vm59 = vcmask 1043456
    %v61 = vsel %vm59, %v27, 0
    %63 = vmatprep.subr.mxu0 0.0
    %64 = vmatpush1.msra.mxu0 0.0
    %65 = vmatprep.subr.mxu0 0.0
    %66 = vmatpush1.msra.mxu0 0.0
    %67 = vmatprep.subr.mxu0 0.0
    %68 = vmatpush1.msra.mxu0 0.0
    %69 = vmatprep.subr.mxu0 0.0
    %70 = vmatpush1.msra.mxu0 0.0
    %71 = vmatprep.subr.mxu0 0.0
    %72 = vmatpush1.msra.mxu0 0.0
    %73 = vmatprep.subr.mxu0 0.0
    %74 = vmatpush1.msra.mxu0 0.0
    %75 = vmatprep.subr.mxu0 0.0
    %76 = vmatpush1.msra.mxu0 0.0
    %77 = vmatprep.subr.mxu0 0.0
    %78 = vmatpush1.msra.mxu0 0.0
    %79 = vmatprep.subr.mxu0 0.0
    %80 = vmatpush1.msra.mxu0 0.0
    %81 = vmatprep.subr.mxu0 0.0
    %82 = vmatpush1.msra.mxu0 0.0
    %83 = vmatprep.subr.mxu0 0.0
    %84 = vmatpush1.msra.mxu0 0.0
    %85 = vmatprep.subr.mxu0 0.0
    %86 = vmatpush1.msra.mxu0 0.0
    %87 = vmatprep.subr.mxu0 0.0
    %88 = vmatpush1.msra.mxu0 0.0
    %89 = vmatprep.subr.mxu0 0.0
    %90 = vmatpush1.msra.mxu0 0.0
    %91 = vmatprep.subr.mxu0 0.0
    %92 = vmatpush1.msra.mxu0 0.0
    %93 = vmatprep.subr.mxu0 0.0
    %94 = vmatpush1.msra.mxu0 %v61
    %95 = vmatprep.subr.mxu0 0.0
    %96 = vmatpush2.msra.mxu0 0.0
    %97 = vmatprep.subr.mxu0 0.0
    %98 = vmatpush2.msra.mxu0 0.0
    %99 = vmatprep.subr.mxu0 0.0
    %100 = vmatpush2.msra.mxu0 0.0
    %101 = vmatprep.subr.mxu0 0.0
    %102 = vmatpush2.msra.mxu0 0.0
    %103 = vmatprep.subr.mxu0 0.0
    %104 = vmatpush2.msra.mxu0 0.0
    %105 = vmatprep.subr.mxu0 0.0
    %106 = vmatpush2.msra.mxu0 0.0
    %107 = vmatprep.subr.mxu0 0.0
    %108 = vmatpush2.msra.mxu0 0.0
    %109 = vmatprep.subr.mxu0 0.0
    %110 = vmatpush2.msra.mxu0 0.0
    %111 = vmatprep.subr.mxu0 0.0
    %112 = vmatpush2.msra.mxu0 0.0
    %113 = vmatprep.subr.mxu0 0.0
    %114 = vmatpush2.msra.mxu0 0.0
    %115 = vmatprep.subr.mxu0 0.0
    %116 = vmatpush2.msra.mxu0 0.0
    %117 = vmatprep.subr.mxu0 0.0
    %118 = vmatpush2.msra.mxu0 0.0
    %119 = vmatprep.subr.mxu0 0.0
    %120 = vmatpush2.msra.mxu0 0.0
    %121 = vmatprep.subr.mxu0 0.0
    %122 = vmatpush2.msra.mxu0 0.0
    %123 = vmatprep.subr.mxu0 0.0
    %124 = vmatpush2.msra.mxu0 0.0
    %125 = vmatprep.subr.mxu0 0.0
    %126 = vmatpush2.msra.mxu0 0.0
    %127 = vmatprep.mubr.f32.mxu0 0.0
    %128 = vmatmul.mubr.f32.gmra.mxu0 %v51
    %v129 = vpop.f32.mrf.mxu0
    %v130 = vadd.f32 %v37, %v129
    %v131 = vpop.f32.mrf.mxu0
    %132 = vmatprep.mubr.f32.mxu0 0.0
    %133 = vmatmul.mubr.f32.gmra.mxu0 %v54
    %v134 = vpop.f32.mrf.mxu0
    %v135 = vadd.f32 %v42, %v134
    %v136 = vpop.f32.mrf.mxu0
    %137 = vmatprep.mubr.f32.mxu0 0.0
    %138 = vmatmul.mubr.f32.gmra.mxu0 %v57
    %v139 = vpop.f32.mrf.mxu0
    %v140 = vadd.f32 %v47, %v139
    %v141 = vpop.f32.mrf.mxu0
    %142 = vdwg.mxu0
    %v143 = vmax.f32 %v130, 0.0
    %v144 = vmax.f32 %v135, 0.0
    %v145 = vmax.f32 %v140, 0.0
    %v146 = vld [vmem:[%s3] sm:$0xff]
    %v147 = vld [vmem:[%s3 + $0x8] sm:$0xff]
    %v148 = vld [vmem:[%s3 + $0x10] sm:$0xff]
    %v149 = vld [vmem:[%s4] sm:$0xff]
    %v150 = vld [vmem:[%s4 + $0x8] sm:$0xff]
    %v151 = vld [vmem:[%s4 + $0x10] sm:$0xff]
    %153 = vset.pattern.permute.xlu0 0
    %154 = vperm.xlu0 %153, %v149
    %v155 = vpop.permute.xlu0 %154
    %158 = vset.pattern.permute.xlu0 0
    %159 = vperm.xlu0 %158, %v150
    %v160 = vpop.permute.xlu0 %159
    %163 = vset.pattern.permute.xlu0 0
    %164 = vperm.xlu0 %163, %v151
    %v165 = vpop.permute.xlu0 %164
    %vm167 = vcmask 195584
    %v169 = vsel %vm167, %v146, 0
    %v172 = vsel %vm167, %v147, 0
    %v175 = vsel %vm167, %v148, 0
    %177 = vmatprep.subr.mxu0 0.0
    %178 = vmatpush1.msra.mxu0 0.0
    %179 = vmatprep.subr.mxu0 0.0
    %180 = vmatpush1.msra.mxu0 0.0
    %181 = vmatprep.subr.mxu0 0.0
    %182 = vmatpush1.msra.mxu0 0.0
    %183 = vmatprep.subr.mxu0 0.0
    %184 = vmatpush1.msra.mxu0 0.0
    %185 = vmatprep.subr.mxu0 0.0
    %186 = vmatpush1.msra.mxu0 0.0
    %187 = vmatprep.subr.mxu0 0.0
    %188 = vmatpush1.msra.mxu0 0.0
    %189 = vmatprep.subr.mxu0 0.0
    %190 = vmatpush1.msra.mxu0 0.0
    %191 = vmatprep.subr.mxu0 0.0
    %192 = vmatpush1.msra.mxu0 0.0
    %193 = vmatprep.subr.mxu0 0.0
    %194 = vmatpush1.msra.mxu0 0.0
    %195 = vmatprep.subr.mxu0 0.0
    %196 = vmatpush1.msra.mxu0 0.0
    %197 = vmatprep.subr.mxu0 0.0
    %198 = vmatpush1.msra.mxu0 0.0
    %199 = vmatprep.subr.mxu0 0.0
    %200 = vmatpush1.msra.mxu0 0.0
    %201 = vmatprep.subr.mxu0 0.0
    %202 = vmatpush1.msra.mxu0 0.0
    %203 = vmatprep.subr.mxu0 0.0
    %204 = vmatpush1.msra.mxu0 %v145
    %205 = vmatprep.subr.mxu0 0.0
    %206 = vmatpush1.msra.mxu0 %v144
    %207 = vmatprep.subr.mxu0 0.0
    %208 = vmatpush1.msra.mxu0 %v143
    %209 = vmatprep.subr.mxu0 0.0
    %210 = vmatpush2.msra.mxu0 0.0
    %211 = vmatprep.subr.mxu0 0.0
    %212 = vmatpush2.msra.mxu0 0.0
    %213 = vmatprep.subr.mxu0 0.0
    %214 = vmatpush2.msra.mxu0 0.0
    %215 = vmatprep.subr.mxu0 0.0
    %216 = vmatpush2.msra.mxu0 0.0
    %217 = vmatprep.subr.mxu0 0.0
    %218 = vmatpush2.msra.mxu0 0.0
    %219 = vmatprep.subr.mxu0 0.0
    %220 = vmatpush2.msra.mxu0 0.0
    %221 = vmatprep.subr.mxu0 0.0
    %222 = vmatpush2.msra.mxu0 0.0
    %223 = vmatprep.subr.mxu0 0.0
    %224 = vmatpush2.msra.mxu0 0.0
    %225 = vmatprep.subr.mxu0 0.0
    %226 = vmatpush2.msra.mxu0 0.0
    %227 = vmatprep.subr.mxu0 0.0
    %228 = vmatpush2.msra.mxu0 0.0
    %229 = vmatprep.subr.mxu0 0.0
    %230 = vmatpush2.msra.mxu0 0.0
    %231 = vmatprep.subr.mxu0 0.0
    %232 = vmatpush2.msra.mxu0 0.0
    %233 = vmatprep.subr.mxu0 0.0
    %234 = vmatpush2.msra.mxu0 0.0
    %235 = vmatprep.subr.mxu0 0.0
    %236 = vmatpush2.msra.mxu0 0.0
    %237 = vmatprep.subr.mxu0 0.0
    %238 = vmatpush2.msra.mxu0 0.0
    %239 = vmatprep.subr.mxu0 0.0
    %240 = vmatpush2.msra.mxu0 0.0
    %241 = vmatprep.mubr.f32.mxu0 0.0
    %242 = vmatmul.mubr.f32.gmra.mxu0 %v169
    %v243 = vpop.f32.mrf.mxu0
    %v244 = vadd.f32 %v155, %v243
    %v245 = vpop.f32.mrf.mxu0
    %246 = vmatprep.mubr.f32.mxu0 0.0
    %247 = vmatmul.mubr.f32.gmra.mxu0 %v172
    %v248 = vpop.f32.mrf.mxu0
    %v249 = vadd.f32 %v160, %v248
    %v250 = vpop.f32.mrf.mxu0
    %251 = vmatprep.mubr.f32.mxu0 0.0
    %252 = vmatmul.mubr.f32.gmra.mxu0 %v175
    %v253 = vpop.f32.mrf.mxu0
    %v254 = vadd.f32 %v165, %v253
    %v255 = vpop.f32.mrf.mxu0
    %256 = vdwg.mxu0
    %v257 = vmax.f32 %v244, 0.0
    %v258 = vmax.f32 %v249, 0.0
    %v259 = vmax.f32 %v254, 0.0
    %v260 = vld [vmem:[%s5] sm:$0x3]
    %v261 = vld [vmem:[%s6] sm:$0x3]
    %263 = vset.pattern.permute.xlu0 0
    %264 = vperm.xlu0 %263, %v261
    %v265 = vpop.permute.xlu0 %264
    %v268 = vsel %vm167, %v260, 0
    %270 = vmatprep.subr.mxu0 0.0
    %271 = vmatpush1.msra.mxu0 0.0
    %272 = vmatprep.subr.mxu0 0.0
    %273 = vmatpush1.msra.mxu0 0.0
    %274 = vmatprep.subr.mxu0 0.0
    %275 = vmatpush1.msra.mxu0 0.0
    %276 = vmatprep.subr.mxu0 0.0
    %277 = vmatpush1.msra.mxu0 0.0
    %278 = vmatprep.subr.mxu0 0.0
    %279 = vmatpush1.msra.mxu0 0.0
    %280 = vmatprep.subr.mxu0 0.0
    %281 = vmatpush1.msra.mxu0 0.0
    %282 = vmatprep.subr.mxu0 0.0
    %283 = vmatpush1.msra.mxu0 0.0
    %284 = vmatprep.subr.mxu0 0.0
    %285 = vmatpush1.msra.mxu0 0.0
    %286 = vmatprep.subr.mxu0 0.0
    %287 = vmatpush1.msra.mxu0 0.0
    %288 = vmatprep.subr.mxu0 0.0
    %289 = vmatpush1.msra.mxu0 0.0
    %290 = vmatprep.subr.mxu0 0.0
    %291 = vmatpush1.msra.mxu0 0.0
    %292 = vmatprep.subr.mxu0 0.0
    %293 = vmatpush1.msra.mxu0 0.0
    %294 = vmatprep.subr.mxu0 0.0
    %295 = vmatpush1.msra.mxu0 0.0
    %296 = vmatprep.subr.mxu0 0.0
    %297 = vmatpush1.msra.mxu0 %v259
    %298 = vmatprep.subr.mxu0 0.0
    %299 = vmatpush1.msra.mxu0 %v258
    %300 = vmatprep.subr.mxu0 0.0
    %301 = vmatpush1.msra.mxu0 %v257
    %302 = vmatprep.subr.mxu0 0.0
    %303 = vmatpush2.msra.mxu0 0.0
    %304 = vmatprep.subr.mxu0 0.0
    %305 = vmatpush2.msra.mxu0 0.0
    %306 = vmatprep.subr.mxu0 0.0
    %307 = vmatpush2.msra.mxu0 0.0
    %308 = vmatprep.subr.mxu0 0.0
    %309 = vmatpush2.msra.mxu0 0.0
    %310 = vmatprep.subr.mxu0 0.0
    %311 = vmatpush2.msra.mxu0 0.0
    %312 = vmatprep.subr.mxu0 0.0
    %313 = vmatpush2.msra.mxu0 0.0
    %314 = vmatprep.subr.mxu0 0.0
    %315 = vmatpush2.msra.mxu0 0.0
    %316 = vmatprep.subr.mxu0 0.0
    %317 = vmatpush2.msra.mxu0 0.0
    %318 = vmatprep.subr.mxu0 0.0
    %319 = vmatpush2.msra.mxu0 0.0
    %320 = vmatprep.subr.mxu0 0.0
    %321 = vmatpush2.msra.mxu0 0.0
    %322 = vmatprep.subr.mxu0 0.0
    %323 = vmatpush2.msra.mxu0 0.0
    %324 = vmatprep.subr.mxu0 0.0
    %325 = vmatpush2.msra.mxu0 0.0
    %326 = vmatprep.subr.mxu0 0.0
    %327 = vmatpush2.msra.mxu0 0.0
    %328 = vmatprep.subr.mxu0 0.0
    %329 = vmatpush2.msra.mxu0 0.0
    %330 = vmatprep.subr.mxu0 0.0
    %331 = vmatpush2.msra.mxu0 0.0
    %332 = vmatprep.subr.mxu0 0.0
    %333 = vmatpush2.msra.mxu0 0.0
    %334 = vmatprep.mubr.f32.mxu0 0.0
    %335 = vmatmul.mubr.f32.gmra.mxu0 %v268
    %v336 = vpop.f32.mrf.mxu0
    %v337 = vadd.f32 %v265, %v336
    %v338 = vpop.f32.mrf.mxu0
    %339 = vdwg.mxu0
    %v341 = vrot.slane %v337, 7
    %v343 = vsub.f32 %v337, %v341
    %v344 = vsub.f32 0.0, %v343
    %v345 = vmul.f32 %v344, 1.442695
    %v346 = vpow.pop %v345
    %v347 = vadd.f32 %v346, 1.0
    %v348 = vrcp.pop %v347
    %v349 = vmul.f32 1.0, %v348
    %v350 = vsub.f32 1.0, %v349
    %351 = vst [vmem:[#allocation2 - $0x1] sm:$0x2] %v350
    %352 = vst [vmem:[#allocation2] sm:$0x2] %v349
    // Predicated region
    $region30: #{tpu_custom_call.1} parent=1 // pred_check
      _
    $region31: #{tpu_custom_call.1} parent=1 // pred_check_branch
      %354 = sbr.rel (0) target = $region33
    $region32: #{tpu_custom_call.1} parent=1 // pred_region
      %s356 = ssub.s32 32, 32
      %357 = vsyncadd [#allocation3], %s356
      %s359 = sshll.u32 [#allocation2], 4
      %s360 = int_to_ptr.vmem [resolvable:$true] %s359
      %362 = dma.vmem_to_hbm [thread:$0]  %s360, 32, %s7, [#allocation3]
    $region33: #{tpu_custom_call.1} parent=1 // pred_fallthru
      _
    // Predicated region
    $region34: #{tpu_custom_call.1} parent=1 // pred_check
      _
    $region35: #{tpu_custom_call.1} parent=1 // pred_check_branch
      %364 = sbr.rel (0) target = $region37
    $region36: #{tpu_custom_call.1} parent=1 // pred_region
      %365 = dma.done [#allocation3], 32
    $region37: #{tpu_custom_call.1} parent=1 // pred_fallthru
      _
    %366 = vsyncpa [#allocation3], 1

</llo_original>
